<compile_context>
chip_gen: v6e
topology: v6e:2x2x1
jax: 0.10.0
libtpu: 0.0.40
codegen_flags: <defaults>
</compile_context>

<pallas_src>
import functools

import jax
import jax.numpy as jnp
from jax.experimental import pallas as pl
from jax.experimental.pallas import tpu as pltpu


def _round_up(x, m):
    return ((x + m - 1) // m) * m


def _pick_tile(n, pref, align):
    """Tile size / padded extent for one axis.

    Prefers `pref`; for small problems splits into two aligned tiles so the
    "parallel" dst axis still sharded across both v7x TensorCores.
    """
    n_al = _round_up(n, align)
    if n_al >= 2 * pref:
        tile = pref
    elif n_al >= 2 * align:
        tile = _round_up((n_al + 1) // 2, align)
    else:
        tile = n_al
    return tile, _round_up(n_al, tile)


def _fused_rgcn_kernel(num_classes, nvalid_ref, rid_ref, a_ref, w_ref,
                       inv_ref, root_ref, b1_ref, wlin_ref, blin_ref, out_ref):
    """Grid: (dst tile i, relation slot rr, src tile k); (rr, k) is the reduction.

    out_ref (f32, lane-padded) doubles as the accumulator for the hidden
    activations; on the last (rr, k) step it is overwritten with the final
    log-probabilities.
    """
    rr = pl.program_id(1)
    kk = pl.program_id(2)

    @pl.when((rr == 0) & (kk == 0))
    def _init():
        # conv1 with identity features: root term = root rows; add bias once.
        out_ref[...] = root_ref[...] + b1_ref[...]

    @pl.when(rr < nvalid_ref[0])
    def _accumulate():
        # int8 0/1/2.. counts -> bf16 (exact) on the VPU, bf16 MXU matmul with
        # f32 accumulation, then exact f32 mean normalization per dst row.
        a = a_ref[...].astype(jnp.bfloat16)
        partial = jnp.dot(a, w_ref[...], preferred_element_type=jnp.float32)
        out_ref[...] += inv_ref[...] * partial

    @pl.when((rr == pl.num_programs(1) - 1) & (kk == pl.num_programs(2) - 1))
    def _epilogue():
        h = jnp.maximum(out_ref[...], 0.0)                       # ReLU
        z = jnp.dot(h.astype(jnp.bfloat16), wlin_ref[...],
                    preferred_element_type=jnp.float32) + blin_ref[...]
        # masked, numerically stable log_softmax over the real class lanes only
        lane = jax.lax.broadcasted_iota(jnp.int32, z.shape, 1)
        valid = lane < num_classes
        zm = jnp.where(valid, z, jnp.float32(-1e30))
        m = jnp.max(zm, axis=-1, keepdims=True)
        e = jnp.where(valid, jnp.exp(zm - m), 0.0)
        lse = jnp.log(jnp.sum(e, axis=-1, keepdims=True))
        out_ref[...] = jnp.where(valid, (zm - m) - lse, 0.0)


@functools.partial(jax.jit,
                   static_argnames=("num_nodes", "num_relations", "num_classes"))
def rgcn_s_forward(params, edge_index, edge_type, *, num_nodes, num_relations,
                   num_classes):
    """Fused RGCNConv(identity input) + ReLU + Linear + log_softmax."""
    hidden = params["basis1"].shape[-1]
    lanes = 128
    # single lane-padded width serving both hidden and class lanes
    wp = max(_round_up(hidden, lanes), _round_up(num_classes, lanes))

    # dst (output rows) and src (contraction K) tiles
    tile_m, n_pad_m = _pick_tile(num_nodes, 512, 32)    # 32: int8 sublane pack
    tile_k, n_pad_k = _pick_tile(num_nodes, 512, 128)   # 128: lane / MXU K dim
    num_k_tiles = n_pad_k // tile_k

    src, dst = edge_index[0], edge_index[1]

    # Dense per-relation 0/1/2.. edge counts, built directly at padded shape.
    # Scatter-add in int32 (robust TPU lowering), stored as int8 for the kernel
    # (1 B/elem on the dominant HBM stream; per-pair multiplicity < 128).
    a_counts = (jnp.zeros((num_relations, n_pad_m, n_pad_k), jnp.int32)
                .at[edge_type, dst, src].add(1)).astype(jnp.int8)

    # Per-(relation, dst-row) mean normalization, applied exactly in f32
    # inside the kernel after the matmul (PyG aggr='mean' semantics).
    deg = (jnp.zeros((num_relations, n_pad_m), jnp.float32)
           .at[edge_type, dst].add(1.0))
    inv_deg = jnp.where(deg > 0, 1.0 / deg, 0.0).reshape(
        num_relations, n_pad_m, 1)

    # Basis decomposition -> per-relation weights; layer-1 input is the implicit
    # identity (x=None in PyG), so the relation message term is simply A_r @ W_r
    # and the root term is just `root`.
    w_rel = jnp.einsum("rb,bio->rio", params["comp1"], params["basis1"])
    w_rel_p = jnp.pad(w_rel, ((0, 0), (0, n_pad_k - num_nodes),
                              (0, wp - hidden))).astype(jnp.bfloat16)
    root_p = jnp.pad(params["root1"],
                     ((0, n_pad_m - num_nodes), (0, wp - hidden))
                     ).astype(jnp.float32)
    b1_p = jnp.pad(params["bias1"], ((0, wp - hidden),)
                   ).reshape(1, wp).astype(jnp.float32)
    wlin_p = jnp.pad(params["lin_w"], ((0, wp - hidden),
                                       (0, wp - num_classes))
                     ).astype(jnp.bfloat16)
    blin_p = jnp.pad(params["lin_b"], ((0, wp - num_classes),)
                     ).reshape(1, wp).astype(jnp.float32)

    # Compacted non-empty relation ids (tail padded with the last valid id so
    # tail grid steps repeat the previous block index and their A/W DMAs are
    # elided); nvalid gates the accumulation.
    rel_counts = jnp.zeros((num_relations,), jnp.int32).at[edge_type].add(1)
    nonempty = rel_counts > 0
    num_valid = jnp.sum(nonempty.astype(jnp.int32))
    idx = jnp.arange(num_relations, dtype=jnp.int32)
    rid_sorted = jnp.sort(jnp.where(nonempty, idx, num_relations))
    last_valid = jnp.where(num_valid > 0,
                           rid_sorted[jnp.maximum(num_valid - 1, 0)], 0)
    rel_ids = jnp.where(rid_sorted >= num_relations, last_valid,
                        rid_sorted).astype(jnp.int32)
    nvalid = num_valid.reshape(1).astype(jnp.int32)

    def a_map(i, rr, k, nvalid_ref, rid_ref):
        tail = rr >= nvalid_ref[0]
        kk = jnp.where(tail, num_k_tiles - 1, k)   # repeat last real block
        return (rid_ref[rr], i, kk)

    def w_map(i, rr, k, nvalid_ref, rid_ref):
        tail = rr >= nvalid_ref[0]
        kk = jnp.where(tail, num_k_tiles - 1, k)
        return (rid_ref[rr], kk, 0)

    grid = (n_pad_m // tile_m, num_relations, num_k_tiles)
    kernel = functools.partial(_fused_rgcn_kernel, num_classes)

    out = pl.pallas_call(
        kernel,
        out_shape=jax.ShapeDtypeStruct((n_pad_m, wp), jnp.float32),
        grid_spec=pltpu.PrefetchScalarGridSpec(
            num_scalar_prefetch=2,
            grid=grid,
            in_specs=[
                # A_r (dst tile, src tile) int8 counts (relation dim squeezed)
                pl.BlockSpec((None, tile_m, tile_k), a_map),
                # W_r k-slab (identity-X layer 1: messages are W_r rows)
                pl.BlockSpec((None, tile_k, wp), w_map),
                # per-relation 1/deg column for this dst tile (exact f32)
                pl.BlockSpec((None, tile_m, 1),
                             lambda i, rr, k, nv, rid: (rid[rr], i, 0)),
                # root rows for this dst tile
                pl.BlockSpec((tile_m, wp), lambda i, rr, k, nv, rid: (i, 0)),
                # conv1 bias
                pl.BlockSpec((1, wp), lambda i, rr, k, nv, rid: (0, 0)),
                # Linear weight / bias
                pl.BlockSpec((wp, wp), lambda i, rr, k, nv, rid: (0, 0)),
                pl.BlockSpec((1, wp), lambda i, rr, k, nv, rid: (0, 0)),
            ],
            out_specs=pl.BlockSpec((tile_m, wp),
                                   lambda i, rr, k, nv, rid: (i, 0)),
        ),
        compiler_params=pltpu.CompilerParams(
            dimension_semantics=("parallel", "arbitrary", "arbitrary"),
            # Working set is bounded and N-independent after K-tiling; leave
            # headroom under v7x's 64 MiB physical VMEM (fine on v5e/v6e too).
            vmem_limit_bytes=48 * 1024 * 1024,
        ),
    )(nvalid, rel_ids, a_counts, w_rel_p, inv_deg, root_p, b1_p, wlin_p, blin_p)

    return out[:num_nodes, :num_classes]


def rgcn_s_reference(params, edge_index, edge_type, num_nodes, num_relations):
    """Pure-JAX reference mirroring the kernel's bf16 matmul / f32-scale math."""
    src, dst = edge_index[0], edge_index[1]
    a = (jnp.zeros((num_relations, num_nodes, num_nodes), jnp.float32)
         .at[edge_type, dst, src].add(1.0))
    deg = a.sum(axis=2, keepdims=True)
    inv_deg = jnp.where(deg > 0, 1.0 / deg, 0.0)
    w_rel = jnp.einsum("rb,bio->rio", params["comp1"], params["basis1"])
    msg_r = jnp.einsum("rij,rjh->rih", a.astype(jnp.bfloat16),
                       w_rel.astype(jnp.bfloat16),
                       preferred_element_type=jnp.float32)
    msg = jnp.sum(inv_deg * msg_r, axis=0)
    h = jax.nn.relu(msg + params["root1"] + params["bias1"])
    z = jnp.dot(h.astype(jnp.bfloat16), params["lin_w"].astype(jnp.bfloat16),
                preferred_element_type=jnp.float32) + params["lin_b"]
    return jax.nn.log_softmax(z, axis=1)


if __name__ == "__main__":
    # Small synthetic "Entities"-like problem.
    NUM_NODES = 64
    NUM_RELATIONS = 4
    NUM_CLASSES = 4
    NUM_EDGES = 128
    HIDDEN = 16
    NUM_BASES = 30

    key = jax.random.PRNGKey(0)
    k_src, k_dst, k_rel, k1, k2, k3, k4, k5 = jax.random.split(key, 8)

    src = jax.random.randint(k_src, (NUM_EDGES,), 0, NUM_NODES)
    dst = jax.random.randint(k_dst, (NUM_EDGES,), 0, NUM_NODES)
    edge_index = jnp.stack([src, dst], axis=0)                   # (2, E)
    edge_type = jax.random.randint(k_rel, (NUM_EDGES,), 0, NUM_RELATIONS)

    def glorot(k, shape):
        fan_in, fan_out = shape[-2], shape[-1]
        scale = jnp.sqrt(6.0 / (fan_in + fan_out))
        return jax.random.uniform(k, shape, jnp.float32, -scale, scale)

    params = {
        # conv1: RGCNConv(num_nodes -> 16, num_bases=30)
        "basis1": glorot(k1, (NUM_BASES, NUM_NODES, HIDDEN)),
        "comp1": glorot(k2, (NUM_RELATIONS, NUM_BASES)),
        "root1": glorot(k3, (NUM_NODES, HIDDEN)),
        "bias1": jnp.zeros((HIDDEN,), jnp.float32),
        # lin: Linear(16 -> num_classes); stored as (in, out) = weight.T
        "lin_w": glorot(k4, (HIDDEN, NUM_CLASSES)),
        "lin_b": jnp.zeros((NUM_CLASSES,), jnp.float32),
    }

    out = rgcn_s_forward(params, edge_index, edge_type,
                         num_nodes=NUM_NODES, num_relations=NUM_RELATIONS,
                         num_classes=NUM_CLASSES)
    out = jax.block_until_ready(out)

    assert out.shape == (NUM_NODES, NUM_CLASSES)
    assert bool(jnp.all(jnp.isfinite(out)))
    # log_softmax rows must normalize to 1 in probability space.
    probs = jnp.sum(jnp.exp(out), axis=1)
    assert bool(jnp.all(jnp.abs(probs - 1.0) < 1e-3))
    # Match the pure-JAX reference (same bf16 matmuls, exact f32 mean-scaling).
    ref = jax.block_until_ready(
        rgcn_s_reference(params, edge_index, edge_type,
                         NUM_NODES, NUM_RELATIONS))
    assert bool(jnp.allclose(out, ref, rtol=1e-2, atol=1e-2))

    print("KERNEL_OK")
</pallas_src>

<mosaic_0001>
module attributes {stable_mosaic.version = 11 : i64} {
  func.func private @main(%arg0: i32) attributes {dimension_semantics = [#tpu.dimension_semantics<core_parallel>], iteration_bounds = array<i64: 2>, tpu.core_type = #tpu.core_type<sc_scalar_subcore>, window_params = []} {
    return
  }
}

module attributes {stable_mosaic.version = 11 : i64} {
  func.func private @main(%arg0: i32) attributes {dimension_semantics = [#tpu.dimension_semantics<core_parallel>], iteration_bounds = array<i64: 2>, tpu.core_type = #tpu.core_type<sc_scalar_subcore>, window_params = []} {
    return
  }
}

module attributes {stable_mosaic.version = 11 : i64} {
  func.func @_fused_rgcn_kernel(%arg0: i32, %arg1: i32, %arg2: i32, %arg3: memref<1xi32, #tpu.memory_space<smem>>, %arg4: memref<4xi32, #tpu.memory_space<smem>>, %arg5: memref<1x32x128xi8, #tpu.memory_space<vmem>>, %arg6: memref<1x128x128xbf16, #tpu.memory_space<vmem>>, %arg7: memref<1x32x1xf32, #tpu.memory_space<vmem>>, %arg8: memref<32x128xf32, #tpu.memory_space<vmem>>, %arg9: memref<1x128xf32, #tpu.memory_space<vmem>>, %arg10: memref<128x128xbf16, #tpu.memory_space<vmem>>, %arg11: memref<1x128xf32, #tpu.memory_space<vmem>>, %arg12: memref<32x128xf32, #tpu.memory_space<vmem>>) attributes {dimension_semantics = [#tpu.dimension_semantics<parallel>, #tpu.dimension_semantics<arbitrary>, #tpu.dimension_semantics<arbitrary>], iteration_bounds = array<i64: 2, 4, 1>, scalar_prefetch = 2 : i64, scratch_operands = 0 : i64, tpu.core_type = #tpu.core_type<tc>, window_params = [{transform_indices = @transform_0, window_bounds = array<i64: 1, 32, 128>}, {transform_indices = @transform_1, window_bounds = array<i64: 1, 128, 128>}, {transform_indices = @transform_2, window_bounds = array<i64: 1, 32, 1>}, {transform_indices = @transform_3, window_bounds = array<i64: 32, 128>}, {pipeline_mode = #tpu.pipeline_mode<synchronous>, transform_indices = @transform_4, window_bounds = array<i64: 1, 128>}, {pipeline_mode = #tpu.pipeline_mode<synchronous>, transform_indices = @transform_5, window_bounds = array<i64: 128, 128>}, {pipeline_mode = #tpu.pipeline_mode<synchronous>, transform_indices = @transform_6, window_bounds = array<i64: 1, 128>}, {transform_indices = @transform_7, window_bounds = array<i64: 32, 128>}]} {
    %c0_i32 = arith.constant 0 : i32
    %0 = arith.cmpi eq, %arg1, %c0_i32 : i32
    %c0_i32_0 = arith.constant 0 : i32
    %1 = arith.cmpi eq, %arg2, %c0_i32_0 : i32
    %2 = arith.andi %0, %1 : i1
    %3 = arith.extui %2 : i1 to i32
    %c0_i32_1 = arith.constant 0 : i32
    %4 = arith.cmpi ne, %3, %c0_i32_1 : i32
    scf.if %4 {
      %c0_5 = arith.constant 0 : index
      %c0_6 = arith.constant 0 : index
      %14 = vector.load %arg8[%c0_5, %c0_6] : memref<32x128xf32, #tpu.memory_space<vmem>>, vector<32x128xf32>
      %c0_7 = arith.constant 0 : index
      %c0_8 = arith.constant 0 : index
      %15 = vector.load %arg9[%c0_7, %c0_8] : memref<1x128xf32, #tpu.memory_space<vmem>>, vector<1x128xf32>
      %16 = vector.broadcast %15 : vector<1x128xf32> to vector<32x128xf32>
      %17 = arith.addf %14, %16 : vector<32x128xf32>
      %c0_9 = arith.constant 0 : index
      %c0_10 = arith.constant 0 : index
      %18 = vector.load %arg12[%c0_9, %c0_10] : memref<32x128xf32, #tpu.memory_space<vmem>>, vector<32x128xf32>
      tpu.vector_store %arg12[%c0_9, %c0_10], %17 {strides = array<i32>} : memref<32x128xf32, #tpu.memory_space<vmem>>, vector<32x128xf32>,
    } else {
    }
    %c0 = arith.constant 0 : index
    %5 = memref.load %arg3[%c0] : memref<1xi32, #tpu.memory_space<smem>>
    %6 = arith.cmpi slt, %arg1, %5 : i32
    %7 = arith.extui %6 : i1 to i32
    %c0_i32_2 = arith.constant 0 : i32
    %8 = arith.cmpi ne, %7, %c0_i32_2 : i32
    scf.if %8 {
      %c0_5 = arith.constant 0 : index
      %c0_6 = arith.constant 0 : index
      %c0_7 = arith.constant 0 : index
      %14 = vector.load %arg5[%c0_5, %c0_6, %c0_7] : memref<1x32x128xi8, #tpu.memory_space<vmem>>, vector<1x32x128xi8>
      %15 = vector.shape_cast %14 : vector<1x32x128xi8> to vector<32x128xi8>
      %16 = arith.sitofp %15 : vector<32x128xi8> to vector<32x128xbf16>
      %c0_8 = arith.constant 0 : index
      %c0_9 = arith.constant 0 : index
      %c0_10 = arith.constant 0 : index
      %17 = vector.load %arg6[%c0_8, %c0_9, %c0_10] : memref<1x128x128xbf16, #tpu.memory_space<vmem>>, vector<1x128x128xbf16>
      %18 = vector.shape_cast %17 : vector<1x128x128xbf16> to vector<128x128xbf16>
      %cst = arith.constant dense<0.000000e+00> : vector<32x128xf32>
      %19 = tpu.matmul %16, %18, %cst {dimension_numbers = #tpu.dot_dimension_numbers<[1], [0], [0], [1], [0, 0, 1, 1], [], []>} : vector<32x128xbf16>, vector<128x128xbf16>, vector<32x128xf32> -> vector<32x128xf32>
      %c0_11 = arith.constant 0 : index
      %c0_12 = arith.constant 0 : index
      %20 = vector.load %arg12[%c0_11, %c0_12] : memref<32x128xf32, #tpu.memory_space<vmem>>, vector<32x128xf32>
      %c0_13 = arith.constant 0 : index
      %c0_14 = arith.constant 0 : index
      %c0_15 = arith.constant 0 : index
      %21 = vector.load %arg7[%c0_13, %c0_14, %c0_15] : memref<1x32x1xf32, #tpu.memory_space<vmem>>, vector<1x32x1xf32>
      %22 = vector.shape_cast %21 : vector<1x32x1xf32> to vector<32x1xf32>
      %23 = vector.broadcast %22 : vector<32x1xf32> to vector<32x128xf32>
      %24 = arith.mulf %23, %19 : vector<32x128xf32>
      %25 = arith.addf %20, %24 : vector<32x128xf32>
      %c0_16 = arith.constant 0 : index
      %c0_17 = arith.constant 0 : index
      %26 = vector.load %arg12[%c0_16, %c0_17] : memref<32x128xf32, #tpu.memory_space<vmem>>, vector<32x128xf32>
      tpu.vector_store %arg12[%c0_16, %c0_17], %25 {strides = array<i32>} : memref<32x128xf32, #tpu.memory_space<vmem>>, vector<32x128xf32>,
    } else {
    }
    %c3_i32 = arith.constant 3 : i32
    %9 = arith.cmpi eq, %arg1, %c3_i32 : i32
    %c0_i32_3 = arith.constant 0 : i32
    %10 = arith.cmpi eq, %arg2, %c0_i32_3 : i32
    %11 = arith.andi %9, %10 : i1
    %12 = arith.extui %11 : i1 to i32
    %c0_i32_4 = arith.constant 0 : i32
    %13 = arith.cmpi ne, %12, %c0_i32_4 : i32
    scf.if %13 {
      %c0_5 = arith.constant 0 : index
      %c0_6 = arith.constant 0 : index
      %14 = vector.load %arg12[%c0_5, %c0_6] : memref<32x128xf32, #tpu.memory_space<vmem>>, vector<32x128xf32>
      %cst = arith.constant 0.000000e+00 : f32
      %15 = vector.broadcast %cst : f32 to vector<32x128xf32>
      %16 = arith.maximumf %14, %15 : vector<32x128xf32>
      %17 = arith.truncf %16 : vector<32x128xf32> to vector<32x128xbf16>
      %c0_7 = arith.constant 0 : index
      %c0_8 = arith.constant 0 : index
      %18 = vector.load %arg10[%c0_7, %c0_8] : memref<128x128xbf16, #tpu.memory_space<vmem>>, vector<128x128xbf16>
      %cst_9 = arith.constant dense<0.000000e+00> : vector<32x128xf32>
      %19 = tpu.matmul %17, %18, %cst_9 {dimension_numbers = #tpu.dot_dimension_numbers<[1], [0], [0], [1], [0, 0, 1, 1], [], []>} : vector<32x128xbf16>, vector<128x128xbf16>, vector<32x128xf32> -> vector<32x128xf32>
      %c0_10 = arith.constant 0 : index
      %c0_11 = arith.constant 0 : index
      %20 = vector.load %arg11[%c0_10, %c0_11] : memref<1x128xf32, #tpu.memory_space<vmem>>, vector<1x128xf32>
      %21 = vector.broadcast %20 : vector<1x128xf32> to vector<32x128xf32>
      %22 = arith.addf %19, %21 : vector<32x128xf32>
      %23 = tpu.iota {dimensions = array<i32: 1>} : vector<32x128xi32>
      %c4_i32 = arith.constant 4 : i32
      %24 = vector.broadcast %c4_i32 : i32 to vector<32x128xi32>
      %25 = arith.cmpi slt, %23, %24 : vector<32x128xi32>
      %cst_12 = arith.constant -1.000000e+30 : f32
      %26 = vector.broadcast %cst_12 : f32 to vector<32x128xf32>
      %27 = arith.select %25, %22, %26 : vector<32x128xi1>, vector<32x128xf32>
      %cst_13 = arith.constant dense<0xFF800000> : vector<32xf32>
      %28 = vector.multi_reduction <maximumf>, %27, %cst_13 [1] : vector<32x128xf32> to vector<32xf32>
      %29 = vector.shape_cast %28 : vector<32xf32> to vector<32x1xf32>
      %30 = vector.broadcast %29 : vector<32x1xf32> to vector<32x128xf32>
      %31 = arith.subf %27, %30 : vector<32x128xf32>
      %32 = math.exp %31 : vector<32x128xf32>
      %cst_14 = arith.constant 0.000000e+00 : f32
      %33 = vector.broadcast %cst_14 : f32 to vector<32x128xf32>
      %34 = arith.select %25, %32, %33 : vector<32x128xi1>, vector<32x128xf32>
      %cst_15 = arith.constant dense<0.000000e+00> : vector<32xf32>
      %35 = vector.multi_reduction <add>, %34, %cst_15 [1] : vector<32x128xf32> to vector<32xf32>
      %36 = vector.shape_cast %35 : vector<32xf32> to vector<32x1xf32>
      %37 = math.log %36 : vector<32x1xf32>
      %38 = vector.broadcast %29 : vector<32x1xf32> to vector<32x128xf32>
      %39 = arith.subf %27, %38 : vector<32x128xf32>
      %40 = vector.broadcast %37 : vector<32x1xf32> to vector<32x128xf32>
      %41 = arith.subf %39, %40 : vector<32x128xf32>
      %cst_16 = arith.constant 0.000000e+00 : f32
      %42 = vector.broadcast %cst_16 : f32 to vector<32x128xf32>
      %43 = arith.select %25, %41, %42 : vector<32x128xi1>, vector<32x128xf32>
      %c0_17 = arith.constant 0 : index
      %c0_18 = arith.constant 0 : index
      %44 = vector.load %arg12[%c0_17, %c0_18] : memref<32x128xf32, #tpu.memory_space<vmem>>, vector<32x128xf32>
      tpu.vector_store %arg12[%c0_17, %c0_18], %43 {strides = array<i32>} : memref<32x128xf32, #tpu.memory_space<vmem>>, vector<32x128xf32>,
    } else {
    }
    return
  }
  func.func @transform_0(%arg0: i32, %arg1: i32, %arg2: i32, %arg3: memref<1xi32, #tpu.memory_space<smem>>, %arg4: memref<4xi32, #tpu.memory_space<smem>>) -> (i32, i32, i32) {
    %c0 = arith.constant 0 : index
    %0 = memref.load %arg3[%c0] : memref<1xi32, #tpu.memory_space<smem>>
    %1 = arith.cmpi sge, %arg1, %0 : i32
    %c0_i32 = arith.constant 0 : i32
    %2 = arith.select %1, %c0_i32, %arg2 : i32
    %3 = arith.index_cast %arg1 : i32 to index
    %4 = memref.load %arg4[%3] : memref<4xi32, #tpu.memory_space<smem>>
    %c0_i32_0 = arith.constant 0 : i32
    return %4, %arg0, %2 : i32, i32, i32
  }
  func.func @transform_1(%arg0: i32, %arg1: i32, %arg2: i32, %arg3: memref<1xi32, #tpu.memory_space<smem>>, %arg4: memref<4xi32, #tpu.memory_space<smem>>) -> (i32, i32, i32) {
    %c0 = arith.constant 0 : index
    %0 = memref.load %arg3[%c0] : memref<1xi32, #tpu.memory_space<smem>>
    %1 = arith.cmpi sge, %arg1, %0 : i32
    %c0_i32 = arith.constant 0 : i32
    %2 = arith.select %1, %c0_i32, %arg2 : i32
    %3 = arith.index_cast %arg1 : i32 to index
    %4 = memref.load %arg4[%3] : memref<4xi32, #tpu.memory_space<smem>>
    %c0_i32_0 = arith.constant 0 : i32
    %c0_i32_1 = arith.constant 0 : i32
    return %4, %2, %c0_i32_0 : i32, i32, i32
  }
  func.func @transform_2(%arg0: i32, %arg1: i32, %arg2: i32, %arg3: memref<1xi32, #tpu.memory_space<smem>>, %arg4: memref<4xi32, #tpu.memory_space<smem>>) -> (i32, i32, i32) {
    %0 = arith.index_cast %arg1 : i32 to index
    %1 = memref.load %arg4[%0] : memref<4xi32, #tpu.memory_space<smem>>
    %c0_i32 = arith.constant 0 : i32
    %c0_i32_0 = arith.constant 0 : i32
    return %1, %arg0, %c0_i32 : i32, i32, i32
  }
  func.func @transform_3(%arg0: i32, %arg1: i32, %arg2: i32, %arg3: memref<1xi32, #tpu.memory_space<smem>>, %arg4: memref<4xi32, #tpu.memory_space<smem>>) -> (i32, i32) {
    %c0_i32 = arith.constant 0 : i32
    %c0_i32_0 = arith.constant 0 : i32
    return %arg0, %c0_i32 : i32, i32
  }
  func.func @transform_4(%arg0: i32, %arg1: i32, %arg2: i32, %arg3: memref<1xi32, #tpu.memory_space<smem>>, %arg4: memref<4xi32, #tpu.memory_space<smem>>) -> (i32, i32) {
    %c0_i32 = arith.constant 0 : i32
    %c0_i32_0 = arith.constant 0 : i32
    %c0_i32_1 = arith.constant 0 : i32
    return %c0_i32, %c0_i32_0 : i32, i32
  }
  func.func @transform_5(%arg0: i32, %arg1: i32, %arg2: i32, %arg3: memref<1xi32, #tpu.memory_space<smem>>, %arg4: memref<4xi32, #tpu.memory_space<smem>>) -> (i32, i32) {
    %c0_i32 = arith.constant 0 : i32
    %c0_i32_0 = arith.constant 0 : i32
    %c0_i32_1 = arith.constant 0 : i32
    return %c0_i32, %c0_i32_0 : i32, i32
  }
  func.func @transform_6(%arg0: i32, %arg1: i32, %arg2: i32, %arg3: memref<1xi32, #tpu.memory_space<smem>>, %arg4: memref<4xi32, #tpu.memory_space<smem>>) -> (i32, i32) {
    %c0_i32 = arith.constant 0 : i32
    %c0_i32_0 = arith.constant 0 : i32
    %c0_i32_1 = arith.constant 0 : i32
    return %c0_i32, %c0_i32_0 : i32, i32
  }
  func.func @transform_7(%arg0: i32, %arg1: i32, %arg2: i32, %arg3: memref<1xi32, #tpu.memory_space<smem>>, %arg4: memref<4xi32, #tpu.memory_space<smem>>) -> (i32, i32) {
    %c0_i32 = arith.constant 0 : i32
    %c0_i32_0 = arith.constant 0 : i32
    return %arg0, %c0_i32 : i32, i32
  }
}

</mosaic_0001>

<llo_original>
// kernel: rgcn_s_forward.1
$region0: #{rgcn_s_forward.1}
  #allocation0 [shape = 'u32[]', space=smem, size = 0x4, offset = 0x4, fixed_abs, tag = 'smem constant byte address 0x4 - core index']
  #allocation1 [shape = 'u32[144,128]{1,0:T(1,128)}', space=vmem, size = 0x12000, scoped, tag = 'internal scratch']
  #allocation2 [shape = 's32[1]{0}', space=sflag, size = 0x4, scoped, tag = 'scoped memory for rgcn_s_forward.1']
  #allocation3 [shape = 's32[1]{0:T(128)S(6)}', space=smem, size = 0x200, scoped, tag = 'prefetched SMEM operand 0']
  #allocation4 [shape = 'u8[512]{0}', space=smem, size = 0x200, scoped, tag = 'prefetched SMEM operand 1']
  %s0 = inlined_call_operand.<no memory space> [shape: s32[1], index: 0, kind: input, shape index: {}]
  %s1 = inlined_call_operand.vmem [shape: s32[4], index: 1, kind: input, shape index: {}]
  %s2 = inlined_call_operand.vmem [shape: s8[4,64,128], index: 2, kind: input, shape index: {}]
  %s3 = inlined_call_operand.vmem [shape: bf16[4,128,128], index: 3, kind: input, shape index: {}]
  %s4 = inlined_call_operand.vmem [shape: f32[4,64,1], index: 4, kind: input, shape index: {}]
  %s5 = inlined_call_operand.vmem [shape: f32[64,128], index: 5, kind: input, shape index: {}]
  %s6 = inlined_call_operand.vmem [shape: f32[1,128], index: 6, kind: input, shape index: {}]
  %s7 = inlined_call_operand.vmem [shape: bf16[128,128], index: 7, kind: input, shape index: {}]
  %s8 = inlined_call_operand.vmem [shape: f32[1,128], index: 8, kind: input, shape index: {}]
  %s9 = inlined_call_operand.vmem [shape: f32[64,128], index: 9, kind: output, shape index: {}]
  %s10 = sld [smem:[#allocation0]]
  $region73: #{rgcn_s_forward.1} parent=0
    _
  %s12 = ssub.s32 1, %s10
  %s13 = scalar_select 0, %s12, %s10
  %14 = sst [smem:[#allocation3]] %s0
  %s15 = sshll.u32 %s1, 4
  %s16 = int_to_ptr.vmem [resolvable:$true] %s15
  %18 = dma.vmem_to_smem %s16, 16, [#allocation4], [#allocation2]
  %19 = dma.done [#allocation2], 16
  %20 = sfence
  loop: start=0, step=1, limit=10
  $region2: #{rgcn_s_forward.1} parent=0 // loop_pre_header
    _
  $region3: #{rgcn_s_forward.1} parent=0 // loop_header
    %s22 = sphi 0, %s26
    %p23 = scmp.ge.s32.totalorder %s22, 10
    %s29 = sphi 0, %s48
    %s30 = sphi 0, %s44
    %s31 = sphi 0, %s40
    %s32 = sphi 0, %s29
    %s33 = sphi 0, %s30
    %s34 = sphi 0, %s31
    %s35 = sphi 0, %s32
    %s36 = sphi 0, %s33
    %s37 = sphi 0, %s34
    %s63 = sphi 0, %s65
    %s66 = sphi 0, %s63
    %s67 = sphi 0, %s66
    %s83 = sphi 0, %s67
    %s99 = sphi 0, %s101
    %s102 = sphi 0, %s99
    %s103 = sphi 0, %s102
    %s119 = sphi 0, %s103
    %s129 = sphi 0, %s131
    %s132 = sphi 0, %s129
    %s133 = sphi 0, %s132
    %s149 = sphi 0, %s133
    %s155 = sphi 0, %s157
    %s158 = sphi 0, %s155
    %s159 = sphi 0, %s158
    %s175 = sphi 0, %s159
    %s179 = sphi 0, %s179
    %s181 = sphi 0, %s179
    %s182 = sphi 0, %s181
    %s196 = sphi 0, %s182
    %s200 = sphi 0, %s200
    %s202 = sphi 0, %s200
    %s203 = sphi 0, %s202
    %s217 = sphi 0, %s203
    %s221 = sphi 0, %s221
    %s223 = sphi 0, %s221
    %s224 = sphi 0, %s223
    %s238 = sphi 0, %s224
    %s244 = sphi 0, %s246
    %s247 = sphi 0, %s244
    %s248 = sphi 0, %s247
    %s264 = sphi 0, %s248
  $region4: #{rgcn_s_forward.1} parent=0 // loop_header_branch
    %25 = sbr.rel (%p23) target = $region8
  $region5: #{rgcn_s_forward.1} parent=0 // loop_body
    %s27 = ssub.s32 %s22, 1
    %s28 = ssub.s32 %s22, 2
    %s38 = sadd.s32 1, %s31
    %p39 = scmp.ge.s32.totalorder %s38, 1
    %s40 = scalar_select %p39, 0, %s38
    %s41 = sadd.s32 1, %s30
    %s42 = scalar_select %p39, %s41, %s30
    %p43 = scmp.ge.s32.totalorder %s42, 4
    %s44 = scalar_select %p43, 0, %s42
    %s45 = sadd.s32 1, %s29
    %s46 = scalar_select %p43, %s45, %s29
    %p47 = scmp.ge.s32.totalorder %s46, 2
    %s48 = scalar_select %p47, 0, %s46
    %s49 = sld [smem:[#allocation3]]
    %p50 = scmp.ge.s32.totalorder %s30, %s49
    %s51 = scalar_select %p50, 0, %s31
    %s52 = sld [smem:[#allocation4 + %s30]]
    %s53 = sld [smem:[#allocation3]]
    %p54 = scmp.ge.s32.totalorder %s44, %s53
    %s55 = scalar_select %p54, 0, %s40
    %s56 = sld [smem:[#allocation4 + %s44]]
    %s57 = ssub.s32 %s52, %s56
    %s58 = ssub.s32 %s29, %s48
    %s59 = sor.u32 %s57, %s58
    %s60 = ssub.s32 %s51, %s55
    %s61 = sor.u32 %s59, %s60
    %p62 = scmp.eq.s32.totalorder %s61, 0
    %s64 = sadd.s32 %s63, 1
    %s65 = scalar_select %p62, %s63, %s64
    %p68 = pneg %p62
    %p69 = scmp.eq.s32.totalorder %s22, 7
    %p70 = por %p68, %p69
    %p71 = scmp.ne.s32.totalorder %s63, %s66
    %p72 = scmp.eq.s32.totalorder %s22, 0
    %p73 = por %p71, %p72
    %p74 = scmp.ne.s32.totalorder %s63, %s66
    %p75 = scmp.eq.s32.totalorder %s27, 7
    %p76 = por %p74, %p75
    %p77 = scmp.ne.s32.totalorder %s66, %s67
    %p78 = scmp.eq.s32.totalorder %s27, 0
    %p79 = por %p77, %p78
    %p80 = scmp.ne.s32.totalorder %s66, %s67
    %p81 = scmp.eq.s32.totalorder %s28, 7
    %p82 = por %p80, %p81
    %p84 = scmp.ne.s32.totalorder %s67, %s83
    %p85 = scmp.eq.s32.totalorder %s28, 0
    %p86 = por %p84, %p85
    %s87 = sld [smem:[#allocation3]]
    %p88 = scmp.ge.s32.totalorder %s30, %s87
    %s89 = scalar_select %p88, 0, %s31
    %s90 = sld [smem:[#allocation4 + %s30]]
    %s91 = sld [smem:[#allocation3]]
    %p92 = scmp.ge.s32.totalorder %s44, %s91
    %s93 = scalar_select %p92, 0, %s40
    %s94 = sld [smem:[#allocation4 + %s44]]
    %s95 = ssub.s32 %s90, %s94
    %s96 = ssub.s32 %s89, %s93
    %s97 = sor.u32 %s95, %s96
    %p98 = scmp.eq.s32.totalorder %s97, 0
    %s100 = sadd.s32 %s99, 1
    %s101 = scalar_select %p98, %s99, %s100
    %p104 = pneg %p98
    %p105 = scmp.eq.s32.totalorder %s22, 7
    %p106 = por %p104, %p105
    %p107 = scmp.ne.s32.totalorder %s99, %s102
    %p108 = scmp.eq.s32.totalorder %s22, 0
    %p109 = por %p107, %p108
    %p110 = scmp.ne.s32.totalorder %s99, %s102
    %p111 = scmp.eq.s32.totalorder %s27, 7
    %p112 = por %p110, %p111
    %p113 = scmp.ne.s32.totalorder %s102, %s103
    %p114 = scmp.eq.s32.totalorder %s27, 0
    %p115 = por %p113, %p114
    %p116 = scmp.ne.s32.totalorder %s102, %s103
    %p117 = scmp.eq.s32.totalorder %s28, 7
    %p118 = por %p116, %p117
    %p120 = scmp.ne.s32.totalorder %s103, %s119
    %p121 = scmp.eq.s32.totalorder %s28, 0
    %p122 = por %p120, %p121
    %s123 = sld [smem:[#allocation4 + %s30]]
    %s124 = sld [smem:[#allocation4 + %s44]]
    %s125 = ssub.s32 %s123, %s124
    %s126 = ssub.s32 %s29, %s48
    %s127 = sor.u32 %s125, %s126
    %p128 = scmp.eq.s32.totalorder %s127, 0
    %s130 = sadd.s32 %s129, 1
    %s131 = scalar_select %p128, %s129, %s130
    %p134 = pneg %p128
    %p135 = scmp.eq.s32.totalorder %s22, 7
    %p136 = por %p134, %p135
    %p137 = scmp.ne.s32.totalorder %s129, %s132
    %p138 = scmp.eq.s32.totalorder %s22, 0
    %p139 = por %p137, %p138
    %p140 = scmp.ne.s32.totalorder %s129, %s132
    %p141 = scmp.eq.s32.totalorder %s27, 7
    %p142 = por %p140, %p141
    %p143 = scmp.ne.s32.totalorder %s132, %s133
    %p144 = scmp.eq.s32.totalorder %s27, 0
    %p145 = por %p143, %p144
    %p146 = scmp.ne.s32.totalorder %s132, %s133
    %p147 = scmp.eq.s32.totalorder %s28, 7
    %p148 = por %p146, %p147
    %p150 = scmp.ne.s32.totalorder %s133, %s149
    %p151 = scmp.eq.s32.totalorder %s28, 0
    %p152 = por %p150, %p151
    %s153 = ssub.s32 %s29, %s48
    %p154 = scmp.eq.s32.totalorder %s153, 0
    %s156 = sadd.s32 %s155, 1
    %s157 = scalar_select %p154, %s155, %s156
    %p160 = pneg %p154
    %p161 = scmp.eq.s32.totalorder %s22, 7
    %p162 = por %p160, %p161
    %p163 = scmp.ne.s32.totalorder %s155, %s158
    %p164 = scmp.eq.s32.totalorder %s22, 0
    %p165 = por %p163, %p164
    %p166 = scmp.ne.s32.totalorder %s155, %s158
    %p167 = scmp.eq.s32.totalorder %s27, 7
    %p168 = por %p166, %p167
    %p169 = scmp.ne.s32.totalorder %s158, %s159
    %p170 = scmp.eq.s32.totalorder %s27, 0
    %p171 = por %p169, %p170
    %p172 = scmp.ne.s32.totalorder %s158, %s159
    %p173 = scmp.eq.s32.totalorder %s28, 7
    %p174 = por %p172, %p173
    %p176 = scmp.ne.s32.totalorder %s159, %s175
    %p177 = scmp.eq.s32.totalorder %s28, 0
    %p178 = por %p176, %p177
    %s180 = sadd.s32 %s179, 1
    %p183 = scmp.eq.s32.totalorder %s22, 7
    %p184 = scmp.ne.s32.totalorder %s179, %s181
    %p185 = scmp.eq.s32.totalorder %s22, 0
    %p186 = por %p184, %p185
    %p187 = scmp.ne.s32.totalorder %s179, %s181
    %p188 = scmp.eq.s32.totalorder %s27, 7
    %p189 = por %p187, %p188
    %p190 = scmp.ne.s32.totalorder %s181, %s182
    %p191 = scmp.eq.s32.totalorder %s27, 0
    %p192 = por %p190, %p191
    %p193 = scmp.ne.s32.totalorder %s181, %s182
    %p194 = scmp.eq.s32.totalorder %s28, 7
    %p195 = por %p193, %p194
    %p197 = scmp.ne.s32.totalorder %s182, %s196
    %p198 = scmp.eq.s32.totalorder %s28, 0
    %p199 = por %p197, %p198
    %s201 = sadd.s32 %s200, 1
    %p204 = scmp.eq.s32.totalorder %s22, 7
    %p205 = scmp.ne.s32.totalorder %s200, %s202
    %p206 = scmp.eq.s32.totalorder %s22, 0
    %p207 = por %p205, %p206
    %p208 = scmp.ne.s32.totalorder %s200, %s202
    %p209 = scmp.eq.s32.totalorder %s27, 7
    %p210 = por %p208, %p209
    %p211 = scmp.ne.s32.totalorder %s202, %s203
    %p212 = scmp.eq.s32.totalorder %s27, 0
    %p213 = por %p211, %p212
    %p214 = scmp.ne.s32.totalorder %s202, %s203
    %p215 = scmp.eq.s32.totalorder %s28, 7
    %p216 = por %p214, %p215
    %p218 = scmp.ne.s32.totalorder %s203, %s217
    %p219 = scmp.eq.s32.totalorder %s28, 0
    %p220 = por %p218, %p219
    %s222 = sadd.s32 %s221, 1
    %p225 = scmp.eq.s32.totalorder %s22, 7
    %p226 = scmp.ne.s32.totalorder %s221, %s223
    %p227 = scmp.eq.s32.totalorder %s22, 0
    %p228 = por %p226, %p227
    %p229 = scmp.ne.s32.totalorder %s221, %s223
    %p230 = scmp.eq.s32.totalorder %s27, 7
    %p231 = por %p229, %p230
    %p232 = scmp.ne.s32.totalorder %s223, %s224
    %p233 = scmp.eq.s32.totalorder %s27, 0
    %p234 = por %p232, %p233
    %p235 = scmp.ne.s32.totalorder %s223, %s224
    %p236 = scmp.eq.s32.totalorder %s28, 7
    %p237 = por %p235, %p236
    %p239 = scmp.ne.s32.totalorder %s224, %s238
    %p240 = scmp.eq.s32.totalorder %s28, 0
    %p241 = por %p239, %p240
    %s242 = ssub.s32 %s29, %s48
    %p243 = scmp.eq.s32.totalorder %s242, 0
    %s245 = sadd.s32 %s244, 1
    %s246 = scalar_select %p243, %s244, %s245
    %p249 = pneg %p243
    %p250 = scmp.eq.s32.totalorder %s22, 7
    %p251 = por %p249, %p250
    %p252 = scmp.ne.s32.totalorder %s244, %s247
    %p253 = scmp.eq.s32.totalorder %s22, 0
    %p254 = por %p252, %p253
    %p255 = scmp.ne.s32.totalorder %s244, %s247
    %p256 = scmp.eq.s32.totalorder %s27, 7
    %p257 = por %p255, %p256
    %p258 = scmp.ne.s32.totalorder %s247, %s248
    %p259 = scmp.eq.s32.totalorder %s27, 0
    %p260 = por %p258, %p259
    %p261 = scmp.ne.s32.totalorder %s247, %s248
    %p262 = scmp.eq.s32.totalorder %s28, 7
    %p263 = por %p261, %p262
    %p265 = scmp.ne.s32.totalorder %s248, %s264
    %p266 = scmp.eq.s32.totalorder %s28, 0
    %p267 = por %p265, %p266
    %p268 = scmp.le.s32.totalorder 1, %s22
    %p269 = scmp.lt.s32.totalorder %s22, 9
    %p270 = pnand %p268, %p269
    %p271 = pneg %p270
    // Predicated region
    $region9: #{rgcn_s_forward.1} parent=5 // pred_check
      _
    $region10: #{rgcn_s_forward.1} parent=5 // pred_check_branch
      %273 = sbr.rel (%p270) target = $region12
    $region11: #{rgcn_s_forward.1} parent=5 // pred_region
      %s274 = ssub.s32 %s22, 1
      // Predicated region
      $region13: #{rgcn_s_forward.1} parent=11 // pred_check
        %p275 = pneg %p192
      $region14: #{rgcn_s_forward.1} parent=11 // pred_check_branch
        %277 = sbr.rel (%p275) target = $region16
      $region15: #{rgcn_s_forward.1} parent=11 // pred_region
        _
      $region16: #{rgcn_s_forward.1} parent=11 // pred_fallthru
        _
      // Predicated region
      $region17: #{rgcn_s_forward.1} parent=11 // pred_check
        %p278 = pneg %p213
      $region18: #{rgcn_s_forward.1} parent=11 // pred_check_branch
        %280 = sbr.rel (%p278) target = $region20
      $region19: #{rgcn_s_forward.1} parent=11 // pred_region
        _
      $region20: #{rgcn_s_forward.1} parent=11 // pred_fallthru
        _
      // Predicated region
      $region21: #{rgcn_s_forward.1} parent=11 // pred_check
        %p281 = pneg %p234
      $region22: #{rgcn_s_forward.1} parent=11 // pred_check_branch
        %283 = sbr.rel (%p281) target = $region24
      $region23: #{rgcn_s_forward.1} parent=11 // pred_region
        _
      $region24: #{rgcn_s_forward.1} parent=11 // pred_fallthru
        _
    $region12: #{rgcn_s_forward.1} parent=5 // pred_fallthru
      _
    %p284 = scmp.lt.s32.totalorder %s22, 8
    // Predicated region
    $region25: #{rgcn_s_forward.1} parent=5 // pred_check
      %p285 = pneg %p284
    $region26: #{rgcn_s_forward.1} parent=5 // pred_check_branch
      %287 = sbr.rel (%p285) target = $region28
    $region27: #{rgcn_s_forward.1} parent=5 // pred_region
      // Predicated region
      $region29: #{rgcn_s_forward.1} parent=27 // pred_check
        %p288 = pneg %p73
      $region30: #{rgcn_s_forward.1} parent=27 // pred_check_branch
        %290 = sbr.rel (%p288) target = $region32
      $region31: #{rgcn_s_forward.1} parent=27 // pred_region
        %s291 = sld [smem:[#allocation3]]
        %p292 = scmp.ge.s32.totalorder %s30, %s291
        %s293 = scalar_select %p292, 0, %s31
        %s294 = sld [smem:[#allocation4 + %s30]]
        %p295 = scmp.lt.s32.totalorder %s294, 3
        %s296 = scalar_select %p295, %s294, 3
        %p297 = scmp.lt.s32.totalorder %s29, 1
        %s298 = scalar_select %p297, %s29, 1
        %p299 = scmp.lt.s32.totalorder %s293, 0
        %s300 = scalar_select %p299, %s293, 0
        %s301 = sadd.s32 %s300, %s298
        %s302 = smul.addr %s296, 2
        %s303 = sadd.s32 %s301, %s302
        %s304 = smul.addr %s303, 8
        %s305 = scalar_lea.vmem %s2, %s304
        %s306 = sld [smem:[#allocation3]]
        %p307 = scmp.ge.s32.totalorder %s30, %s306
        %s308 = scalar_select %p307, 0, %s31
        %s309 = sld [smem:[#allocation4 + %s30]]
      $region32: #{rgcn_s_forward.1} parent=27 // pred_fallthru
        _
      // Predicated region
      $region33: #{rgcn_s_forward.1} parent=27 // pred_check
        %p310 = pneg %p109
      $region34: #{rgcn_s_forward.1} parent=27 // pred_check_branch
        %312 = sbr.rel (%p310) target = $region36
      $region35: #{rgcn_s_forward.1} parent=27 // pred_region
        %s313 = sld [smem:[#allocation3]]
        %p314 = scmp.ge.s32.totalorder %s30, %s313
        %s315 = scalar_select %p314, 0, %s31
        %s316 = sld [smem:[#allocation4 + %s30]]
        %s317 = smul.u32 16, %s315
        %p318 = scmp.lt.s32.totalorder %s316, 3
        %s319 = scalar_select %p318, %s316, 3
        %p320 = scmp.lt.s32.totalorder %s317, 15
        %s321 = scalar_select %p320, %s317, 15
        %s322 = smul.addr %s319, 16
        %s323 = sadd.s32 %s321, %s322
        %s324 = smul.addr %s323, 4
        %s325 = scalar_lea.vmem %s3, %s324
        %s326 = sld [smem:[#allocation3]]
        %p327 = scmp.ge.s32.totalorder %s30, %s326
        %s328 = scalar_select %p327, 0, %s31
        %s329 = sld [smem:[#allocation4 + %s30]]
        %s330 = smul.u32 16, %s328
      $region36: #{rgcn_s_forward.1} parent=27 // pred_fallthru
        _
      // Predicated region
      $region37: #{rgcn_s_forward.1} parent=27 // pred_check
        %p331 = pneg %p139
      $region38: #{rgcn_s_forward.1} parent=27 // pred_check_branch
        %333 = sbr.rel (%p331) target = $region40
      $region39: #{rgcn_s_forward.1} parent=27 // pred_region
        %s334 = sld [smem:[#allocation4 + %s30]]
        %s335 = smul.u32 4, %s29
        %p336 = scmp.lt.s32.totalorder %s334, 3
        %s337 = scalar_select %p336, %s334, 3
        %p338 = scmp.lt.s32.totalorder %s335, 7
        %s339 = scalar_select %p338, %s335, 7
        %s340 = smul.addr %s337, 8
        %s341 = sadd.s32 %s339, %s340
        %s342 = smul.addr %s341, 8
        %s343 = scalar_lea.vmem %s4, %s342
        %s344 = sld [smem:[#allocation4 + %s30]]
        %s345 = smul.u32 4, %s29
      $region40: #{rgcn_s_forward.1} parent=27 // pred_fallthru
        _
      // Predicated region
      $region41: #{rgcn_s_forward.1} parent=27 // pred_check
        %p346 = pneg %p165
      $region42: #{rgcn_s_forward.1} parent=27 // pred_check_branch
        %348 = sbr.rel (%p346) target = $region44
      $region43: #{rgcn_s_forward.1} parent=27 // pred_region
        %s349 = smul.u32 4, %s29
        %p350 = scmp.lt.s32.totalorder %s349, 7
        %s351 = scalar_select %p350, %s349, 7
        %s352 = smul.addr %s351, 8
        %s353 = scalar_lea.vmem %s5, %s352
        %s354 = smul.u32 4, %s29
      $region44: #{rgcn_s_forward.1} parent=27 // pred_fallthru
        _
    $region28: #{rgcn_s_forward.1} parent=5 // pred_fallthru
      _
    %p355 = scmp.le.s32.totalorder 1, %s22
    %p356 = scmp.lt.s32.totalorder %s22, 9
    %p357 = pnand %p355, %p356
    %p358 = pneg %p357
    // Predicated region
    $region45: #{rgcn_s_forward.1} parent=5 // pred_check
      _
    $region46: #{rgcn_s_forward.1} parent=5 // pred_check_branch
      %360 = sbr.rel (%p357) target = $region48
    $region47: #{rgcn_s_forward.1} parent=5 // pred_region
      %s361 = ssub.s32 %s22, 1
      %s362 = sld [smem:[#allocation3]]
      %p363 = scmp.ge.s32.totalorder %s33, %s362
      %s364 = scalar_select %p363, 0, %s34
      %s365 = sld [smem:[#allocation4 + %s33]]
      %p366 = scmp.lt.s32.totalorder %s365, 3
      %s367 = scalar_select %p366, %s365, 3
      %p368 = scmp.lt.s32.totalorder %s32, 1
      %s369 = scalar_select %p368, %s32, 1
      %p370 = scmp.lt.s32.totalorder %s364, 0
      %s371 = scalar_select %p370, %s364, 0
      %s372 = sadd.s32 %s371, %s369
      %s373 = smul.addr %s367, 2
      %s374 = sadd.s32 %s372, %s373
      %s375 = smul.addr %s374, 8
      %s376 = scalar_lea.vmem %s2, %s375
      %p377 = pneg %p79
      %p378 = pneg %p76
      %s379 = sld [smem:[#allocation3]]
      %p380 = scmp.ge.s32.totalorder %s33, %s379
      %s381 = scalar_select %p380, 0, %s34
      %s382 = sld [smem:[#allocation4 + %s33]]
      %s383 = smul.u32 16, %s381
      %p384 = scmp.lt.s32.totalorder %s382, 3
      %s385 = scalar_select %p384, %s382, 3
      %p386 = scmp.lt.s32.totalorder %s383, 15
      %s387 = scalar_select %p386, %s383, 15
      %s388 = smul.addr %s385, 16
      %s389 = sadd.s32 %s387, %s388
      %s390 = smul.addr %s389, 4
      %s391 = scalar_lea.vmem %s3, %s390
      %p392 = pneg %p115
      %p393 = pneg %p112
      %s394 = sld [smem:[#allocation4 + %s33]]
      %s395 = smul.u32 4, %s32
      %p396 = scmp.lt.s32.totalorder %s394, 3
      %s397 = scalar_select %p396, %s394, 3
      %p398 = scmp.lt.s32.totalorder %s395, 7
      %s399 = scalar_select %p398, %s395, 7
      %s400 = smul.addr %s397, 8
      %s401 = sadd.s32 %s399, %s400
      %s402 = smul.addr %s401, 8
      %s403 = scalar_lea.vmem %s4, %s402
      %p404 = pneg %p145
      %p405 = pneg %p142
      %s406 = smul.u32 4, %s32
      %p407 = scmp.lt.s32.totalorder %s406, 7
      %s408 = scalar_select %p407, %s406, 7
      %s409 = smul.addr %s408, 8
      %s410 = scalar_lea.vmem %s5, %s409
      %p411 = pneg %p171
      %p412 = pneg %p168
      %p413 = pneg %p192
      %p414 = pneg %p189
      %p415 = pneg %p213
      %p416 = pneg %p210
      %p417 = pneg %p234
      %p418 = pneg %p231
      %p419 = pneg %p260
      %p420 = pneg %p257
      %s421 = smul.u32 4, %s32
      %p422 = scmp.lt.s32.totalorder %s421, 7
      %s423 = scalar_select %p422, %s421, 7
      %s424 = smul.addr %s423, 8
      %s425 = scalar_lea.vmem %s9, %s424
      %s426 = sld [smem:[#allocation3]]
      %p427 = scmp.ge.s32.totalorder %s33, %s426
      %s428 = scalar_select %p427, 0, %s34
      %s429 = sld [smem:[#allocation4 + %s33]]
      %p430 = scmp.lt.s32.totalorder %s429, 3
      %s431 = scalar_select %p430, %s429, 3
      %p432 = scmp.lt.s32.totalorder %s32, 1
      %s433 = scalar_select %p432, %s32, 1
      %p434 = scmp.lt.s32.totalorder %s428, 0
      %s435 = scalar_select %p434, %s428, 0
      %s436 = sadd.s32 %s435, %s433
      %s437 = smul.addr %s431, 2
      %s438 = sadd.s32 %s436, %s437
      %s439 = smul.addr %s438, 8
      %s440 = scalar_lea.vmem %s2, %s439
      %s441 = sld [smem:[#allocation3]]
      %p442 = scmp.ge.s32.totalorder %s33, %s441
      %s443 = scalar_select %p442, 0, %s34
      %s444 = sld [smem:[#allocation4 + %s33]]
      %s445 = sld [smem:[#allocation3]]
      %p446 = scmp.ge.s32.totalorder %s33, %s445
      %s447 = scalar_select %p446, 0, %s34
      %s448 = sld [smem:[#allocation4 + %s33]]
      %s449 = smul.u32 16, %s447
      %p450 = scmp.lt.s32.totalorder %s448, 3
      %s451 = scalar_select %p450, %s448, 3
      %p452 = scmp.lt.s32.totalorder %s449, 15
      %s453 = scalar_select %p452, %s449, 15
      %s454 = smul.addr %s451, 16
      %s455 = sadd.s32 %s453, %s454
      %s456 = smul.addr %s455, 4
      %s457 = scalar_lea.vmem %s3, %s456
      %s458 = sld [smem:[#allocation3]]
      %p459 = scmp.ge.s32.totalorder %s33, %s458
      %s460 = scalar_select %p459, 0, %s34
      %s461 = sld [smem:[#allocation4 + %s33]]
      %s462 = smul.u32 16, %s460
      %s463 = sld [smem:[#allocation4 + %s33]]
      %s464 = smul.u32 4, %s32
      %p465 = scmp.lt.s32.totalorder %s463, 3
      %s466 = scalar_select %p465, %s463, 3
      %p467 = scmp.lt.s32.totalorder %s464, 7
      %s468 = scalar_select %p467, %s464, 7
      %s469 = smul.addr %s466, 8
      %s470 = sadd.s32 %s468, %s469
      %s471 = smul.addr %s470, 8
      %s472 = scalar_lea.vmem %s4, %s471
      %s473 = sld [smem:[#allocation4 + %s33]]
      %s474 = smul.u32 4, %s32
      %s475 = smul.u32 4, %s32
      %p476 = scmp.lt.s32.totalorder %s475, 7
      %s477 = scalar_select %p476, %s475, 7
      %s478 = smul.addr %s477, 8
      %s479 = scalar_lea.vmem %s5, %s478
      %s480 = smul.u32 4, %s32
      %s481 = smul.u32 4, %s32
      %p482 = scmp.lt.s32.totalorder %s481, 7
      %s483 = scalar_select %p482, %s481, 7
      %s484 = smul.addr %s483, 8
      %s485 = scalar_lea.vmem %s9, %s484
      %s486 = smul.u32 4, %s32
      %p488 = scmp.eq.s32.totalorder %s33, 0
      %p489 = scmp.eq.s32.totalorder %s34, 0
      %p490 = pnand %p488, %p489
      %p491 = pneg %p490
      // Predicated region
      $region49: #{rgcn_s_forward.1} parent=47 // pred_check
        _
      $region50: #{rgcn_s_forward.1} parent=47 // pred_check_branch
        %493 = sbr.rel (%p490) target = $region52
      $region51: #{rgcn_s_forward.1} parent=47 // pred_region
        %v494 = vld [vmem:[%s479] sm:$0xff]
        %v495 = vld [vmem:[%s479 + $0x8] sm:$0xff]
        %v496 = vld [vmem:[%s479 + $0x10] sm:$0xff]
        %v497 = vld [vmem:[%s479 + $0x18] sm:$0xff]
        %v498 = vld [vmem:[%s6] sm:$0x1]
        %v500 = vlaneseq
        %v501 = vshrl.u32 %v500, 7
        %v502 = vsub.s32 0, %v501
        %v503 = vrot.slane %v498, %v502
        %v505 = vadd.f32 %v494, %v503
        %v506 = vadd.f32 %v495, %v503
        %v507 = vadd.f32 %v496, %v503
        %v508 = vadd.f32 %v497, %v503
        %509 = vst [vmem:[%s485] sm:$0xff] %v505
        %510 = vst [vmem:[%s485 + $0x8] sm:$0xff] %v506
        %511 = vst [vmem:[%s485 + $0x10] sm:$0xff] %v507
        %512 = vst [vmem:[%s485 + $0x18] sm:$0xff] %v508
      $region52: #{rgcn_s_forward.1} parent=47 // pred_fallthru
        _
      %s513 = sld [smem:[#allocation3]]
      %p514 = scmp.lt.s32.totalorder %s33, %s513
      // Predicated region
      $region53: #{rgcn_s_forward.1} parent=47 // pred_check
        %p515 = pneg %p514
      $region54: #{rgcn_s_forward.1} parent=47 // pred_check_branch
        %517 = sbr.rel (%p515) target = $region56
      $region55: #{rgcn_s_forward.1} parent=47 // pred_region
        %v518 = vld [vmem:[%s440] sm:$0xff]
        %v519 = vunpack.c.l.s8.bf16 %v518
        %v520 = vunpack.c.h.s8.bf16 %v518
        %v521 = vld [vmem:[%s457] sm:$0xf]
        %v522 = vld [vmem:[%s457 + $0x4] sm:$0xf]
        %v523 = vld [vmem:[%s457 + $0x8] sm:$0xf]
        %v524 = vld [vmem:[%s457 + $0xc] sm:$0xf]
        %v525 = vld [vmem:[%s457 + $0x10] sm:$0xf]
        %v526 = vld [vmem:[%s457 + $0x14] sm:$0xf]
        %v527 = vld [vmem:[%s457 + $0x18] sm:$0xf]
        %v528 = vld [vmem:[%s457 + $0x1c] sm:$0xf]
        %v529 = vld [vmem:[%s457 + $0x20] sm:$0xf]
        %v530 = vld [vmem:[%s457 + $0x24] sm:$0xf]
        %v531 = vld [vmem:[%s457 + $0x28] sm:$0xf]
        %v532 = vld [vmem:[%s457 + $0x2c] sm:$0xf]
        %v533 = vld [vmem:[%s457 + $0x30] sm:$0xf]
        %v534 = vld [vmem:[%s457 + $0x34] sm:$0xf]
        %v535 = vld [vmem:[%s457 + $0x38] sm:$0xf]
        %v536 = vld [vmem:[%s457 + $0x3c] sm:$0xf]
        %v553 = vunpack.c.l.b16 %v521
        %v554 = vunpack.c.l.b16 %v522
        %v555 = vunpack.c.l.b16 %v523
        %v556 = vunpack.c.l.b16 %v524
        %v557 = vunpack.c.l.b16 %v525
        %v558 = vunpack.c.l.b16 %v526
        %v559 = vunpack.c.l.b16 %v527
        %v560 = vunpack.c.l.b16 %v528
        %v561 = vunpack.c.l.b16 %v529
        %v562 = vunpack.c.l.b16 %v530
        %v563 = vunpack.c.l.b16 %v531
        %v564 = vunpack.c.l.b16 %v532
        %v565 = vunpack.c.l.b16 %v533
        %v566 = vunpack.c.l.b16 %v534
        %v567 = vunpack.c.l.b16 %v535
        %v568 = vunpack.c.l.b16 %v536
        %v569 = vpack.c.b16 %v554, %v553
        %v570 = vpack.c.b16 %v556, %v555
        %v571 = vpack.c.b16 %v558, %v557
        %v572 = vpack.c.b16 %v560, %v559
        %v573 = vpack.c.b16 %v562, %v561
        %v574 = vpack.c.b16 %v564, %v563
        %v575 = vpack.c.b16 %v566, %v565
        %v576 = vpack.c.b16 %v568, %v567
        %585 = vmatprep.subr.bf16.mxu0 0
        %586 = vmatpush1.bf16.msra.mxu0 %v576
        %587 = vmatprep.subr.bf16.mxu0 0
        %588 = vmatpush1.bf16.msra.mxu0 %v575
        %589 = vmatprep.subr.bf16.mxu0 0
        %590 = vmatpush1.bf16.msra.mxu0 %v574
        %591 = vmatprep.subr.bf16.mxu0 0
        %592 = vmatpush1.bf16.msra.mxu0 %v573
        %593 = vmatprep.subr.bf16.mxu0 0
        %594 = vmatpush1.bf16.msra.mxu0 %v572
        %595 = vmatprep.subr.bf16.mxu0 0
        %596 = vmatpush1.bf16.msra.mxu0 %v571
        %597 = vmatprep.subr.bf16.mxu0 0
        %598 = vmatpush1.bf16.msra.mxu0 %v570
        %599 = vmatprep.subr.bf16.mxu0 0
        %600 = vmatpush1.bf16.msra.mxu0 %v569
        %601 = vmatprep.subr.bf16.mxu0 0
        %602 = vmatpush2.bf16.msra.mxu0 0
        %603 = vmatprep.subr.bf16.mxu0 0
        %604 = vmatpush2.bf16.msra.mxu0 0
        %605 = vmatprep.subr.bf16.mxu0 0
        %606 = vmatpush2.bf16.msra.mxu0 0
        %607 = vmatprep.subr.bf16.mxu0 0
        %608 = vmatpush2.bf16.msra.mxu0 0
        %609 = vmatprep.subr.bf16.mxu0 0
        %610 = vmatpush2.bf16.msra.mxu0 0
        %611 = vmatprep.subr.bf16.mxu0 0
        %612 = vmatpush2.bf16.msra.mxu0 0
        %613 = vmatprep.subr.bf16.mxu0 0
        %614 = vmatpush2.bf16.msra.mxu0 0
        %615 = vmatprep.subr.bf16.mxu0 0
        %616 = vmatpush2.bf16.msra.mxu0 0
        %617 = vmatprep.mubr.bf16.mxu0 0
        %618 = vmatmul.mubr.bf16.gmra.mxu0 %v519
        %v619 = vpop.f32.mrf.mxu0
        %v620 = vadd.f32 0.0, %v619
        %v621 = vpop.f32.mrf.mxu0
        %v622 = vpop.f32.mrf.mxu0
        %v623 = vadd.f32 0.0, %v622
        %v624 = vpop.f32.mrf.mxu0
        %625 = vmatprep.mubr.bf16.mxu0 0
        %626 = vmatmul.mubr.bf16.gmra.mxu0 %v520
        %v627 = vpop.f32.mrf.mxu0
        %v628 = vadd.f32 0.0, %v627
        %v629 = vpop.f32.mrf.mxu0
        %v630 = vpop.f32.mrf.mxu0
        %v631 = vadd.f32 0.0, %v630
        %v632 = vpop.f32.mrf.mxu0
        %633 = vdwg.mxu0
        %v634 = vld [vmem:[%s485] sm:$0xff]
        %v635 = vld [vmem:[%s485 + $0x8] sm:$0xff]
        %v636 = vld [vmem:[%s485 + $0x10] sm:$0xff]
        %v637 = vld [vmem:[%s485 + $0x18] sm:$0xff]
        %v638 = vld [vmem:[%s472] sm:$0xff]
        %v639 = vld [vmem:[%s472 + $0x8] sm:$0xff]
        %v640 = vld [vmem:[%s472 + $0x10] sm:$0xff]
        %v641 = vld [vmem:[%s472 + $0x18] sm:$0xff]
        %643 = vset.pattern.permute.xlu0 0
        %644 = vperm.xlu0 %643, %v638
        %v645 = vpop.permute.xlu0 %644
        %648 = vset.pattern.permute.xlu0 0
        %649 = vperm.xlu0 %648, %v639
        %v650 = vpop.permute.xlu0 %649
        %653 = vset.pattern.permute.xlu0 0
        %654 = vperm.xlu0 %653, %v640
        %v655 = vpop.permute.xlu0 %654
        %658 = vset.pattern.permute.xlu0 0
        %659 = vperm.xlu0 %658, %v641
        %v660 = vpop.permute.xlu0 %659
        %v662 = vmul.f32 %v645, %v620
        %v663 = vmul.f32 %v650, %v623
        %v664 = vmul.f32 %v655, %v628
        %v665 = vmul.f32 %v660, %v631
        %v666 = vadd.f32 %v634, %v662
        %v667 = vadd.f32 %v635, %v663
        %v668 = vadd.f32 %v636, %v664
        %v669 = vadd.f32 %v637, %v665
        %670 = vst [vmem:[%s485] sm:$0xff] %v666
        %671 = vst [vmem:[%s485 + $0x8] sm:$0xff] %v667
        %672 = vst [vmem:[%s485 + $0x10] sm:$0xff] %v668
        %673 = vst [vmem:[%s485 + $0x18] sm:$0xff] %v669
      $region56: #{rgcn_s_forward.1} parent=47 // pred_fallthru
        _
      %p674 = scmp.eq.s32.totalorder %s33, 3
      %p675 = pnand %p674, %p489
      %p676 = pneg %p675
      // Predicated region
      $region57: #{rgcn_s_forward.1} parent=47 // pred_check
        _
      $region58: #{rgcn_s_forward.1} parent=47 // pred_check_branch
        %678 = sbr.rel (%p675) target = $region60
      $region59: #{rgcn_s_forward.1} parent=47 // pred_region
        %v679 = vld [vmem:[%s485] sm:$0xff]
        %v680 = vld [vmem:[%s485 + $0x8] sm:$0xff]
        %v681 = vld [vmem:[%s485 + $0x10] sm:$0xff]
        %v682 = vld [vmem:[%s485 + $0x18] sm:$0xff]
        %v683 = vmax.f32 %v679, 0.0
        %v684 = vmax.f32 %v680, 0.0
        %v685 = vmax.f32 %v681, 0.0
        %v686 = vmax.f32 %v682, 0.0
        %v687 = vpack.c.bf16 %v684, %v683
        %v688 = vpack.c.bf16 %v686, %v685
        %v689 = vld [vmem:[%s7] sm:$0xf]
        %v690 = vld [vmem:[%s7 + $0x4] sm:$0xf]
        %v691 = vld [vmem:[%s7 + $0x8] sm:$0xf]
        %v692 = vld [vmem:[%s7 + $0xc] sm:$0xf]
        %v693 = vld [vmem:[%s7 + $0x10] sm:$0xf]
        %v694 = vld [vmem:[%s7 + $0x14] sm:$0xf]
        %v695 = vld [vmem:[%s7 + $0x18] sm:$0xf]
        %v696 = vld [vmem:[%s7 + $0x1c] sm:$0xf]
        %v697 = vld [vmem:[%s7 + $0x20] sm:$0xf]
        %v698 = vld [vmem:[%s7 + $0x24] sm:$0xf]
        %v699 = vld [vmem:[%s7 + $0x28] sm:$0xf]
        %v700 = vld [vmem:[%s7 + $0x2c] sm:$0xf]
        %v701 = vld [vmem:[%s7 + $0x30] sm:$0xf]
        %v702 = vld [vmem:[%s7 + $0x34] sm:$0xf]
        %v703 = vld [vmem:[%s7 + $0x38] sm:$0xf]
        %v704 = vld [vmem:[%s7 + $0x3c] sm:$0xf]
        %v705 = vld [vmem:[%s8] sm:$0x1]
        %v707 = vlaneseq
        %v708 = vshrl.u32 %v707, 7
        %v709 = vsub.s32 0, %v708
        %v710 = vrot.slane %v705, %v709
        %v728 = vunpack.c.l.b16 %v689
        %v729 = vunpack.c.l.b16 %v690
        %v730 = vunpack.c.l.b16 %v691
        %v731 = vunpack.c.l.b16 %v692
        %v732 = vunpack.c.l.b16 %v693
        %v733 = vunpack.c.l.b16 %v694
        %v734 = vunpack.c.l.b16 %v695
        %v735 = vunpack.c.l.b16 %v696
        %v736 = vunpack.c.l.b16 %v697
        %v737 = vunpack.c.l.b16 %v698
        %v738 = vunpack.c.l.b16 %v699
        %v739 = vunpack.c.l.b16 %v700
        %v740 = vunpack.c.l.b16 %v701
        %v741 = vunpack.c.l.b16 %v702
        %v742 = vunpack.c.l.b16 %v703
        %v743 = vunpack.c.l.b16 %v704
        %v744 = vpack.c.b16 %v729, %v728
        %v745 = vpack.c.b16 %v731, %v730
        %v746 = vpack.c.b16 %v733, %v732
        %v747 = vpack.c.b16 %v735, %v734
        %v748 = vpack.c.b16 %v737, %v736
        %v749 = vpack.c.b16 %v739, %v738
        %v750 = vpack.c.b16 %v741, %v740
        %v751 = vpack.c.b16 %v743, %v742
        %760 = vmatprep.subr.bf16.mxu0 0
        %761 = vmatpush1.bf16.msra.mxu0 %v751
        %762 = vmatprep.subr.bf16.mxu0 0
        %763 = vmatpush1.bf16.msra.mxu0 %v750
        %764 = vmatprep.subr.bf16.mxu0 0
        %765 = vmatpush1.bf16.msra.mxu0 %v749
        %766 = vmatprep.subr.bf16.mxu0 0
        %767 = vmatpush1.bf16.msra.mxu0 %v748
        %768 = vmatprep.subr.bf16.mxu0 0
        %769 = vmatpush1.bf16.msra.mxu0 %v747
        %770 = vmatprep.subr.bf16.mxu0 0
        %771 = vmatpush1.bf16.msra.mxu0 %v746
        %772 = vmatprep.subr.bf16.mxu0 0
        %773 = vmatpush1.bf16.msra.mxu0 %v745
        %774 = vmatprep.subr.bf16.mxu0 0
        %775 = vmatpush1.bf16.msra.mxu0 %v744
        %776 = vmatprep.subr.bf16.mxu0 0
        %777 = vmatpush2.bf16.msra.mxu0 0
        %778 = vmatprep.subr.bf16.mxu0 0
        %779 = vmatpush2.bf16.msra.mxu0 0
        %780 = vmatprep.subr.bf16.mxu0 0
        %781 = vmatpush2.bf16.msra.mxu0 0
        %782 = vmatprep.subr.bf16.mxu0 0
        %783 = vmatpush2.bf16.msra.mxu0 0
        %784 = vmatprep.subr.bf16.mxu0 0
        %785 = vmatpush2.bf16.msra.mxu0 0
        %786 = vmatprep.subr.bf16.mxu0 0
        %787 = vmatpush2.bf16.msra.mxu0 0
        %788 = vmatprep.subr.bf16.mxu0 0
        %789 = vmatpush2.bf16.msra.mxu0 0
        %790 = vmatprep.subr.bf16.mxu0 0
        %791 = vmatpush2.bf16.msra.mxu0 0
        %792 = vmatprep.mubr.bf16.mxu0 0
        %793 = vmatmul.mubr.bf16.gmra.mxu0 %v687
        %v794 = vpop.f32.mrf.mxu0
        %v795 = vadd.f32 %v710, %v794
        %v796 = vpop.f32.mrf.mxu0
        %v797 = vpop.f32.mrf.mxu0
        %v798 = vadd.f32 %v710, %v797
        %v799 = vpop.f32.mrf.mxu0
        %800 = vmatprep.mubr.bf16.mxu0 0
        %801 = vmatmul.mubr.bf16.gmra.mxu0 %v688
        %v802 = vpop.f32.mrf.mxu0
        %v803 = vadd.f32 %v710, %v802
        %v804 = vpop.f32.mrf.mxu0
        %v805 = vpop.f32.mrf.mxu0
        %v806 = vadd.f32 %v710, %v805
        %v807 = vpop.f32.mrf.mxu0
        %808 = vdwg.mxu0
        %v809 = vlaneseq
        %v810 = vand.u32 %v809, 127
        %vm811 = vcmp.lt.s32.totalorder %v810, 4
        %v812 = vsel %vm811, %v795, -1e+30
        %v813 = vsel %vm811, %v798, -1e+30
        %v814 = vsel %vm811, %v803, -1e+30
        %v815 = vsel %vm811, %v806, -1e+30
        %816 = vmax.xlane.f32.xlu0 %v812
        %v817 = vpop.xlane.xlu0 %816
        %818 = vmax.xlane.f32.xlu0 %v813
        %v819 = vpop.xlane.xlu0 %818
        %820 = vmax.xlane.f32.xlu0 %v814
        %v821 = vpop.xlane.xlu0 %820
        %822 = vmax.xlane.f32.xlu0 %v815
        %v823 = vpop.xlane.xlu0 %822
        %v824 = vsub.f32 %v812, %v817
        %v825 = vsub.f32 %v813, %v819
        %v826 = vsub.f32 %v814, %v821
        %v827 = vsub.f32 %v815, %v823
        %v828 = vmul.f32 %v824, 1.442695
        %v829 = vpow.pop %v828
        %v830 = vmul.f32 %v825, 1.442695
        %v831 = vpow.pop %v830
        %v832 = vmul.f32 %v826, 1.442695
        %v833 = vpow.pop %v832
        %v834 = vmul.f32 %v827, 1.442695
        %v835 = vpow.pop %v834
        %v836 = vsel %vm811, %v829, 0.0
        %v837 = vsel %vm811, %v831, 0.0
        %v838 = vsel %vm811, %v833, 0.0
        %v839 = vsel %vm811, %v835, 0.0
        %840 = vadd.xlane.f32.xlu0 %v836
        %v841 = vpop.xlane.xlu0 %840
        %842 = vadd.xlane.f32.xlu0 %v837
        %v843 = vpop.xlane.xlu0 %842
        %844 = vadd.xlane.f32.xlu0 %v838
        %v845 = vpop.xlane.xlu0 %844
        %846 = vadd.xlane.f32.xlu0 %v839
        %v847 = vpop.xlane.xlu0 %846
        %v848 = vlog2.pop %v841
        %v849 = vmul.f32 %v848, 0.6931472
        %v850 = vlog2.pop %v843
        %v851 = vmul.f32 %v850, 0.6931472
        %v852 = vlog2.pop %v845
        %v853 = vmul.f32 %v852, 0.6931472
        %v854 = vlog2.pop %v847
        %v855 = vmul.f32 %v854, 0.6931472
        %v856 = vsub.f32 %v824, %v849
        %v857 = vsub.f32 %v825, %v851
        %v858 = vsub.f32 %v826, %v853
        %v859 = vsub.f32 %v827, %v855
        %v860 = vsel %vm811, %v856, 0.0
        %v861 = vsel %vm811, %v857, 0.0
        %v862 = vsel %vm811, %v858, 0.0
        %v863 = vsel %vm811, %v859, 0.0
        %864 = vst [vmem:[%s485] sm:$0xff] %v860
        %865 = vst [vmem:[%s485 + $0x8] sm:$0xff] %v861
        %866 = vst [vmem:[%s485 + $0x10] sm:$0xff] %v862
        %867 = vst [vmem:[%s485 + $0x18] sm:$0xff] %v863
      $region60: #{rgcn_s_forward.1} parent=47 // pred_fallthru
        _
      %s868 = smul.u32 4, %s32
      %p869 = scmp.lt.s32.totalorder %s868, 7
      %s870 = scalar_select %p869, %s868, 7
      %s871 = smul.addr %s870, 8
      %s872 = scalar_lea.vmem %s9, %s871
      // Predicated region
      $region61: #{rgcn_s_forward.1} parent=47 // pred_check
        %p873 = pneg %p257
      $region62: #{rgcn_s_forward.1} parent=47 // pred_check_branch
        %875 = sbr.rel (%p873) target = $region64
      $region63: #{rgcn_s_forward.1} parent=47 // pred_region
        %s876 = smul.u32 4, %s32
      $region64: #{rgcn_s_forward.1} parent=47 // pred_fallthru
        _
    $region48: #{rgcn_s_forward.1} parent=5 // pred_fallthru
      _
    %p877 = scmp.le.s32.totalorder 2, %s22
    // Predicated region
    $region65: #{rgcn_s_forward.1} parent=5 // pred_check
      %p878 = pneg %p877
    $region66: #{rgcn_s_forward.1} parent=5 // pred_check_branch
      %880 = sbr.rel (%p878) target = $region68
    $region67: #{rgcn_s_forward.1} parent=5 // pred_region
      %s881 = ssub.s32 %s22, 2
      // Predicated region
      $region69: #{rgcn_s_forward.1} parent=67 // pred_check
        %p882 = pneg %p263
      $region70: #{rgcn_s_forward.1} parent=67 // pred_check_branch
        %884 = sbr.rel (%p882) target = $region72
      $region71: #{rgcn_s_forward.1} parent=67 // pred_region
        %s885 = smul.u32 4, %s35
        %p886 = scmp.lt.s32.totalorder %s885, 7
        %s887 = scalar_select %p886, %s885, 7
        %s888 = smul.addr %s887, 8
        %s889 = scalar_lea.vmem %s9, %s888
      $region72: #{rgcn_s_forward.1} parent=67 // pred_fallthru
        _
    $region68: #{rgcn_s_forward.1} parent=5 // pred_fallthru
      _
  $region6: #{rgcn_s_forward.1} parent=0 // loop_footer
    %s26 = sadd.s32 1, %s22
  $region7: #{rgcn_s_forward.1} parent=0 // loop_footer_branch
    %21 = sbr.rel target = $region3
  $region8: #{rgcn_s_forward.1} parent=0 // loop_exit
    _

</llo_original>
